<compile_context>
chip_gen: v6e
topology: v6e:2x2x1
jax: 0.10.0
libtpu: 0.0.40
codegen_flags: <defaults>
</compile_context>

<pallas_src>
import jax
import jax.numpy as jnp
from jax.experimental import pallas as pl
from jax.experimental.pallas import tpu as pltpu


def _realnvp_fwd_kernel(x_ref, params_ref, y_ref):
    """Forward chain y = ((x*e^{s0}+t0)*e^{s1}+t1)... composed into one FMA."""
    num_couplings = params_ref.shape[0]
    # Compose the chain on (1, D) rows: f(x) = x*A + B.
    a = jnp.ones_like(params_ref[0, 0:1, :], dtype=jnp.float32)     # (1, D)
    b = jnp.zeros_like(a)                                           # (1, D)
    for c in range(num_couplings):                                  # static unroll, C small
        p = params_ref[c]                                           # (2, D)
        es = jnp.exp(p[0:1, :].astype(jnp.float32))                 # EUP, (1, D)
        t = p[1:2, :].astype(jnp.float32)
        a = a * es
        b = b * es + t
    # Apply once to the full batch tile (broadcast over sublanes).
    x = x_ref[...].astype(jnp.float32)                              # (TB, D)
    y_ref[...] = (x * a + b).astype(y_ref.dtype)


def _realnvp_rev_kernel(x_ref, params_ref, y_ref):
    """Reverse chain y = (...((x - t_{C-1}) e^{-s_{C-1}}) ... - t0) e^{-s0}, composed."""
    num_couplings = params_ref.shape[0]
    a = jnp.ones_like(params_ref[0, 0:1, :], dtype=jnp.float32)     # (1, D)
    b = jnp.zeros_like(a)                                           # (1, D)
    for c in reversed(range(num_couplings)):
        p = params_ref[c]
        es_inv = jnp.exp(-p[0:1, :].astype(jnp.float32))            # (1, D)
        t = p[1:2, :].astype(jnp.float32)
        a = a * es_inv
        b = (b - t) * es_inv
    x = x_ref[...].astype(jnp.float32)
    y_ref[...] = (x * a + b).astype(y_ref.dtype)


def _pick_batch_tile(B, D, itemsize, vmem_budget_bytes=8 * 1024 * 1024):
    """Largest batch tile that divides B and keeps 2x(x tile)+2x(y tile) under budget.

    Budget is conservative (~8 MiB << 32 MiB default scoped VMEM) so it is safe
    on v7x's 64 MiB physical VMEM as well as v5e/v6e.
    """
    max_rows = max(8, vmem_budget_bytes // (4 * D * itemsize))
    for tb in (2048, 1024, 512, 256, 128, 64, 32, 16, 8):
        if tb <= max_rows and tb <= B and B % tb == 0:
            return tb
    return B   # small/awkward B: single full-array block (exempt from (8,128) rule)


def _run_chain(kernel, x, params):
    """Apply the fused coupling-chain kernel over batch tiles."""
    B, D = x.shape
    C = params.shape[0]
    tb = _pick_batch_tile(B, D, x.dtype.itemsize)
    grid = (B // tb,)
    return pl.pallas_call(
        kernel,
        out_shape=jax.ShapeDtypeStruct((B, D), x.dtype),
        grid=grid,
        in_specs=[
            pl.BlockSpec((tb, D), lambda i: (i, 0)),        # x: streamed batch tiles
            pl.BlockSpec((C, 2, D), lambda i: (0, 0, 0)),   # params: constant, resident
        ],
        out_specs=pl.BlockSpec((tb, D), lambda i: (i, 0)),
        compiler_params=pltpu.CompilerParams(
            dimension_semantics=("parallel",)),             # independent tiles (v7x dual-TC)
    )(x, params)


class AffineCoupling:
    """JAX/Pallas port of the PyTorch AffineCoupling module."""

    def __init__(self, dim, key):
        k1, k2 = jax.random.split(key)
        scale = jax.random.normal(k1, (1, dim), dtype=jnp.float32)
        shift = jax.random.normal(k2, (1, dim), dtype=jnp.float32)
        # Packed (2, D): one parameter block -> one DMA per call.
        self.params = jnp.concatenate([scale, shift], axis=0)

    @property
    def scale(self):
        return self.params[0:1, :]

    @property
    def shift(self):
        return self.params[1:2, :]

    def __call__(self, x, reverse=False):
        p = self.params[None]                   # (1, 2, D): chain of length 1
        if not reverse:
            y = _run_chain(_realnvp_fwd_kernel, x, p)
            return (y, self.scale)
        return _run_chain(_realnvp_rev_kernel, x, p)


class RealNVP:
    """Chain of affine couplings; all couplings fused into one Pallas kernel call."""

    def __init__(self, dims, num_couplings, key):
        keys = jax.random.split(key, num_couplings)
        self.couplings = [AffineCoupling(dims, k) for k in keys]

    def _stacked_params(self):
        return jnp.stack([c.params for c in self.couplings], axis=0)   # (C, 2, D)

    def __call__(self, x, reverse=False):
        params = self._stacked_params()
        if not reverse:
            y = _run_chain(_realnvp_fwd_kernel, x, params)
            # log|det J| = sum_c scale_c.sum(dim=1): parameter-only (no x dependence),
            # so a tiny plain-JAX reduction outside the kernel; shape (1,) like torch.
            log_det_jacobian = jnp.sum(params[:, 0, :]).reshape(1)
            return (y, log_det_jacobian)
        return _run_chain(_realnvp_rev_kernel, x, params)


if __name__ == "__main__":
    key = jax.random.PRNGKey(0)
    k_model, k_x = jax.random.split(key)

    dims, num_couplings, batch = 2, 6, 8      # matches the PyTorch spec (dims=2, 6 couplings)
    model = RealNVP(dims, num_couplings, k_model)
    x = jax.random.normal(k_x, (batch, dims), dtype=jnp.float32)

    # forward
    y, log_det = jax.block_until_ready(model(x, reverse=False))

    # plain-JAX reference (sequential, like the torch module)
    y_ref = x
    ld_ref = jnp.zeros((1,), jnp.float32)
    for c in model.couplings:
        y_ref = y_ref * jnp.exp(c.scale) + c.shift
        ld_ref = ld_ref + jnp.sum(c.scale, axis=1)
    assert jnp.allclose(y, y_ref, atol=1e-5, rtol=1e-5)
    assert jnp.allclose(log_det, ld_ref, atol=1e-5, rtol=1e-5)

    # reverse should invert forward
    x_rec = jax.block_until_ready(model(y, reverse=True))
    assert jnp.allclose(x_rec, x, atol=1e-3, rtol=1e-3)

    # single AffineCoupling also matches the torch module semantics
    y1, s1 = model.couplings[0](x, reverse=False)
    y1 = jax.block_until_ready(y1)
    assert jnp.allclose(
        y1, x * jnp.exp(model.couplings[0].scale) + model.couplings[0].shift,
        atol=1e-5, rtol=1e-5)
    assert jnp.array_equal(s1, model.couplings[0].scale)
    x1_rec = jax.block_until_ready(model.couplings[0](y1, reverse=True))
    assert jnp.allclose(x1_rec, x, atol=1e-4, rtol=1e-4)

    print("KERNEL_OK")
</pallas_src>

<mosaic_0001>
module attributes {stable_mosaic.version = 11 : i64} {
  func.func @_realnvp_fwd_kernel(%arg0: i32, %arg1: memref<8x2xf32, #tpu.memory_space<vmem>>, %arg2: memref<6x2x2xf32, #tpu.memory_space<vmem>>, %arg3: memref<8x2xf32, #tpu.memory_space<vmem>>) attributes {dimension_semantics = [#tpu.dimension_semantics<parallel>], iteration_bounds = array<i64: 1>, scalar_prefetch = 0 : i64, scratch_operands = 0 : i64, tpu.core_type = #tpu.core_type<tc>, window_params = [{transform_indices = @transform_0, window_bounds = array<i64: 8, 2>}, {pipeline_mode = #tpu.pipeline_mode<synchronous>, transform_indices = @transform_1, window_bounds = array<i64: 6, 2, 2>}, {transform_indices = @transform_2, window_bounds = array<i64: 8, 2>}]} {
    %cst = arith.constant 1.000000e+00 : f32
    %0 = vector.broadcast %cst : f32 to vector<1x2xf32>
    %cst_0 = arith.constant 0.000000e+00 : f32
    %1 = vector.broadcast %cst_0 : f32 to vector<1x2xf32>
    %c0 = arith.constant 0 : index
    %c0_1 = arith.constant 0 : index
    %c0_2 = arith.constant 0 : index
    %2 = vector.load %arg2[%c0, %c0_1, %c0_2] : memref<6x2x2xf32, #tpu.memory_space<vmem>>, vector<1x2x2xf32>
    %3 = vector.shape_cast %2 : vector<1x2x2xf32> to vector<2x2xf32>
    %4 = vector.extract_strided_slice %3 {offsets = [0, 0], sizes = [1, 2], strides = [1, 1]} : vector<2x2xf32> to vector<1x2xf32>
    %5 = math.exp %4 : vector<1x2xf32>
    %6 = vector.extract_strided_slice %3 {offsets = [1, 0], sizes = [1, 2], strides = [1, 1]} : vector<2x2xf32> to vector<1x2xf32>
    %7 = arith.mulf %0, %5 : vector<1x2xf32>
    %8 = arith.mulf %1, %5 : vector<1x2xf32>
    %9 = arith.addf %8, %6 : vector<1x2xf32>
    %c1 = arith.constant 1 : index
    %c0_3 = arith.constant 0 : index
    %c0_4 = arith.constant 0 : index
    %10 = vector.load %arg2[%c1, %c0_3, %c0_4] : memref<6x2x2xf32, #tpu.memory_space<vmem>>, vector<1x2x2xf32>
    %11 = vector.shape_cast %10 : vector<1x2x2xf32> to vector<2x2xf32>
    %12 = vector.extract_strided_slice %11 {offsets = [0, 0], sizes = [1, 2], strides = [1, 1]} : vector<2x2xf32> to vector<1x2xf32>
    %13 = math.exp %12 : vector<1x2xf32>
    %14 = vector.extract_strided_slice %11 {offsets = [1, 0], sizes = [1, 2], strides = [1, 1]} : vector<2x2xf32> to vector<1x2xf32>
    %15 = arith.mulf %7, %13 : vector<1x2xf32>
    %16 = arith.mulf %9, %13 : vector<1x2xf32>
    %17 = arith.addf %16, %14 : vector<1x2xf32>
    %c2 = arith.constant 2 : index
    %c0_5 = arith.constant 0 : index
    %c0_6 = arith.constant 0 : index
    %18 = vector.load %arg2[%c2, %c0_5, %c0_6] : memref<6x2x2xf32, #tpu.memory_space<vmem>>, vector<1x2x2xf32>
    %19 = vector.shape_cast %18 : vector<1x2x2xf32> to vector<2x2xf32>
    %20 = vector.extract_strided_slice %19 {offsets = [0, 0], sizes = [1, 2], strides = [1, 1]} : vector<2x2xf32> to vector<1x2xf32>
    %21 = math.exp %20 : vector<1x2xf32>
    %22 = vector.extract_strided_slice %19 {offsets = [1, 0], sizes = [1, 2], strides = [1, 1]} : vector<2x2xf32> to vector<1x2xf32>
    %23 = arith.mulf %15, %21 : vector<1x2xf32>
    %24 = arith.mulf %17, %21 : vector<1x2xf32>
    %25 = arith.addf %24, %22 : vector<1x2xf32>
    %c3 = arith.constant 3 : index
    %c0_7 = arith.constant 0 : index
    %c0_8 = arith.constant 0 : index
    %26 = vector.load %arg2[%c3, %c0_7, %c0_8] : memref<6x2x2xf32, #tpu.memory_space<vmem>>, vector<1x2x2xf32>
    %27 = vector.shape_cast %26 : vector<1x2x2xf32> to vector<2x2xf32>
    %28 = vector.extract_strided_slice %27 {offsets = [0, 0], sizes = [1, 2], strides = [1, 1]} : vector<2x2xf32> to vector<1x2xf32>
    %29 = math.exp %28 : vector<1x2xf32>
    %30 = vector.extract_strided_slice %27 {offsets = [1, 0], sizes = [1, 2], strides = [1, 1]} : vector<2x2xf32> to vector<1x2xf32>
    %31 = arith.mulf %23, %29 : vector<1x2xf32>
    %32 = arith.mulf %25, %29 : vector<1x2xf32>
    %33 = arith.addf %32, %30 : vector<1x2xf32>
    %c4 = arith.constant 4 : index
    %c0_9 = arith.constant 0 : index
    %c0_10 = arith.constant 0 : index
    %34 = vector.load %arg2[%c4, %c0_9, %c0_10] : memref<6x2x2xf32, #tpu.memory_space<vmem>>, vector<1x2x2xf32>
    %35 = vector.shape_cast %34 : vector<1x2x2xf32> to vector<2x2xf32>
    %36 = vector.extract_strided_slice %35 {offsets = [0, 0], sizes = [1, 2], strides = [1, 1]} : vector<2x2xf32> to vector<1x2xf32>
    %37 = math.exp %36 : vector<1x2xf32>
    %38 = vector.extract_strided_slice %35 {offsets = [1, 0], sizes = [1, 2], strides = [1, 1]} : vector<2x2xf32> to vector<1x2xf32>
    %39 = arith.mulf %31, %37 : vector<1x2xf32>
    %40 = arith.mulf %33, %37 : vector<1x2xf32>
    %41 = arith.addf %40, %38 : vector<1x2xf32>
    %c5 = arith.constant 5 : index
    %c0_11 = arith.constant 0 : index
    %c0_12 = arith.constant 0 : index
    %42 = vector.load %arg2[%c5, %c0_11, %c0_12] : memref<6x2x2xf32, #tpu.memory_space<vmem>>, vector<1x2x2xf32>
    %43 = vector.shape_cast %42 : vector<1x2x2xf32> to vector<2x2xf32>
    %44 = vector.extract_strided_slice %43 {offsets = [0, 0], sizes = [1, 2], strides = [1, 1]} : vector<2x2xf32> to vector<1x2xf32>
    %45 = math.exp %44 : vector<1x2xf32>
    %46 = vector.extract_strided_slice %43 {offsets = [1, 0], sizes = [1, 2], strides = [1, 1]} : vector<2x2xf32> to vector<1x2xf32>
    %47 = arith.mulf %39, %45 : vector<1x2xf32>
    %48 = arith.mulf %41, %45 : vector<1x2xf32>
    %49 = arith.addf %48, %46 : vector<1x2xf32>
    %c0_13 = arith.constant 0 : index
    %c0_14 = arith.constant 0 : index
    %50 = vector.load %arg1[%c0_13, %c0_14] : memref<8x2xf32, #tpu.memory_space<vmem>>, vector<8x2xf32>
    %51 = vector.broadcast %47 : vector<1x2xf32> to vector<8x2xf32>
    %52 = arith.mulf %50, %51 : vector<8x2xf32>
    %53 = vector.broadcast %49 : vector<1x2xf32> to vector<8x2xf32>
    %54 = arith.addf %52, %53 : vector<8x2xf32>
    %c0_15 = arith.constant 0 : index
    %c0_16 = arith.constant 0 : index
    %55 = vector.load %arg3[%c0_15, %c0_16] : memref<8x2xf32, #tpu.memory_space<vmem>>, vector<8x2xf32>
    tpu.vector_store %arg3[%c0_15, %c0_16], %54 {strides = array<i32>} : memref<8x2xf32, #tpu.memory_space<vmem>>, vector<8x2xf32>,
    return
  }
  func.func @transform_0(%arg0: i32) -> (i32, i32) {
    %c0_i32 = arith.constant 0 : i32
    %c0_i32_0 = arith.constant 0 : i32
    return %arg0, %c0_i32 : i32, i32
  }
  func.func @transform_1(%arg0: i32) -> (i32, i32, i32) {
    %c0_i32 = arith.constant 0 : i32
    %c0_i32_0 = arith.constant 0 : i32
    %c0_i32_1 = arith.constant 0 : i32
    %c0_i32_2 = arith.constant 0 : i32
    return %c0_i32, %c0_i32_0, %c0_i32_1 : i32, i32, i32
  }
  func.func @transform_2(%arg0: i32) -> (i32, i32) {
    %c0_i32 = arith.constant 0 : i32
    %c0_i32_0 = arith.constant 0 : i32
    return %arg0, %c0_i32 : i32, i32
  }
}

</mosaic_0001>

<llo_original>
// kernel: tpu_custom_call.1
$region0: #{tpu_custom_call.1}
  #allocation0 [shape = 'u32[]', space=smem, size = 0x4, offset = 0x4, fixed_abs, tag = 'smem constant byte address 0x4 - core index']
  #allocation1 [shape = 'u32[144,128]{1,0:T(1,128)}', space=vmem, size = 0x12000, scoped, tag = 'internal scratch']
  %s0 = inlined_call_operand.vmem [shape: f32[8,2], index: 0, kind: input, shape index: {}]
  %s1 = inlined_call_operand.vmem [shape: f32[6,2,2], index: 1, kind: input, shape index: {}]
  %s2 = inlined_call_operand.vmem [shape: f32[8,2], index: 2, kind: output, shape index: {}]
  %s3 = sld [smem:[#allocation0]]
  $region18: #{tpu_custom_call.1} parent=0
    _
  %s5 = ssub.s32 1, %s3
  %s6 = scalar_select 0, %s5, %s3
  // Predicated region
  $region2: #{tpu_custom_call.1} parent=0 // pred_check
    _
  $region3: #{tpu_custom_call.1} parent=0 // pred_check_branch
    %8 = sbr.rel (0) target = $region5
  $region4: #{tpu_custom_call.1} parent=0 // pred_region
    _
  $region5: #{tpu_custom_call.1} parent=0 // pred_fallthru
    _
  // Predicated region
  $region6: #{tpu_custom_call.1} parent=0 // pred_check
    _
  $region7: #{tpu_custom_call.1} parent=0 // pred_check_branch
    %10 = sbr.rel (0) target = $region9
  $region8: #{tpu_custom_call.1} parent=0 // pred_region
    _
  $region9: #{tpu_custom_call.1} parent=0 // pred_fallthru
    _
  %v11 = vld [vmem:[%s1] sm:$0x3]
  %v12 = vmul.f32 %v11, 1.442695
  %v13 = vpow.pop %v12
  %v14 = vmul.f32 %v13, 0.0
  %v16 = vrot.slane %v11, 1
  %v18 = vadd.f32 %v14, %v16
  %s19 = scalar_lea.vmem %s1, 2
  %v20 = vld [vmem:[%s19] sm:$0x3]
  %v21 = vmul.f32 %v20, 1.442695
  %v22 = vpow.pop %v21
  %v23 = vmul.f32 %v13, %v22
  %v24 = vmul.f32 %v18, %v22
  %v26 = vrot.slane %v20, 1
  %v28 = vadd.f32 %v24, %v26
  %s29 = scalar_lea.vmem %s1, 4
  %v30 = vld [vmem:[%s29] sm:$0x3]
  %v31 = vmul.f32 %v30, 1.442695
  %v32 = vpow.pop %v31
  %v33 = vmul.f32 %v23, %v32
  %v34 = vmul.f32 %v28, %v32
  %v36 = vrot.slane %v30, 1
  %v38 = vadd.f32 %v34, %v36
  %s39 = scalar_lea.vmem %s1, 6
  %v40 = vld [vmem:[%s39] sm:$0x3]
  %v41 = vmul.f32 %v40, 1.442695
  %v42 = vpow.pop %v41
  %v43 = vmul.f32 %v33, %v42
  %v44 = vmul.f32 %v38, %v42
  %v46 = vrot.slane %v40, 1
  %v48 = vadd.f32 %v44, %v46
  %s49 = scalar_lea.vmem %s1, 8
  %v50 = vld [vmem:[%s49] sm:$0x3]
  %v51 = vmul.f32 %v50, 1.442695
  %v52 = vpow.pop %v51
  %v53 = vmul.f32 %v43, %v52
  %v54 = vmul.f32 %v48, %v52
  %v56 = vrot.slane %v50, 1
  %v58 = vadd.f32 %v54, %v56
  %s59 = scalar_lea.vmem %s1, 10
  %v60 = vld [vmem:[%s59] sm:$0x3]
  %v61 = vmul.f32 %v60, 1.442695
  %v62 = vpow.pop %v61
  %v63 = vmul.f32 %v53, %v62
  %v64 = vmul.f32 %v58, %v62
  %v66 = vrot.slane %v60, 1
  %v68 = vadd.f32 %v64, %v66
  %v69 = vld [vmem:[%s0] sm:$0xff]
  %v70 = vlaneseq
  %v71 = vshrl.u32 %v70, 7
  %v72 = vsub.s32 0, %v71
  %v73 = vrot.slane %v63, %v72
  %v74 = vmul.f32 %v69, %v73
  %v75 = vlaneseq
  %v76 = vshrl.u32 %v75, 7
  %v77 = vsub.s32 0, %v76
  %v78 = vrot.slane %v68, %v77
  %v79 = vadd.f32 %v74, %v78
  %vm80 = vcmask 15360
  %81 = vst.msk [vmem:[%s2] sm:$0xff] %vm80, %v79
  // Predicated region
  $region10: #{tpu_custom_call.1} parent=0 // pred_check
    _
  $region11: #{tpu_custom_call.1} parent=0 // pred_check_branch
    %83 = sbr.rel (0) target = $region13
  $region12: #{tpu_custom_call.1} parent=0 // pred_region
    _
  $region13: #{tpu_custom_call.1} parent=0 // pred_fallthru
    _
  // Predicated region
  $region14: #{tpu_custom_call.1} parent=0 // pred_check
    _
  $region15: #{tpu_custom_call.1} parent=0 // pred_check_branch
    %85 = sbr.rel (0) target = $region17
  $region16: #{tpu_custom_call.1} parent=0 // pred_region
    _
  $region17: #{tpu_custom_call.1} parent=0 // pred_fallthru
    _

</llo_original>
